<compile_context>
chip_gen: v5e
topology: v5e:2x2
jax: 0.10.0
libtpu: 0.0.40
codegen_flags: <defaults>
</compile_context>

<pallas_src>
import functools

import jax
import jax.numpy as jnp
from jax.experimental import pallas as pl
from jax.experimental.pallas import tpu as pltpu


def _gce_kernel(labels_ref, pred_ref, out_ref, *, q, total_n, tile_n):
    # pred_ref: (C, tile_n) logits, batch in lanes; labels_ref: (1, tile_n) int32
    logits = pred_ref[...].astype(jnp.float32)                      # (C, tn)
    lab = labels_ref[...]                                           # (1, tn)

    # ---- stable softmax pieces over the class (sublane) axis ----
    m = jnp.max(logits, axis=0, keepdims=True)                      # (1, tn)
    e = jnp.exp(logits - m)                                         # (C, tn)
    denom = jnp.sum(e, axis=0, keepdims=True)                       # (1, tn)

    # ---- gather exp(logit_y - m) via one-hot compare (reuses e; no extra exp) ----
    cls = jax.lax.broadcasted_iota(jnp.int32, logits.shape, 0)      # (C, tn)
    one_hot = (cls == lab).astype(jnp.float32)                      # (C, tn)
    e_y = jnp.sum(one_hot * e, axis=0, keepdims=True)               # (1, tn)

    # EUP approximate reciprocal + one Newton step -> ~f32 precision, VALU-cheap divide.
    inv = pl.reciprocal(denom, approx=True)
    inv = inv * (2.0 - denom * inv)

    # p_y = clamp(softmax(pred)[label], 1e-6, 1.0)  (all ops on (1, tn) tiles)
    p_y = jnp.clip(e_y * inv, 1e-6, 1.0)

    # ---- (1 - p_y**q) / q  (p_y >= 1e-6, so log is safe) ----
    loss = (1.0 - jnp.exp(q * jnp.log(p_y))) * (1.0 / q)            # (1, tn)

    # zero out padded batch columns, write lane-dense per-example losses
    col = jax.lax.broadcasted_iota(jnp.int32, loss.shape, 1) + pl.program_id(0) * tile_n
    out_ref[...] = jnp.where(col < total_n, loss, 0.0)


def gce_loss(pred, labels, *, num_classes=10, q=0.7, tile_n=2048):
    """pred: (N, C) float logits, labels: (N,) int.  Returns scalar mean GCE loss."""
    n, c = pred.shape
    assert c == num_classes

    # Lane-dense tiling over the batch; don't over-pad tiny batches.
    tile_n = min(int(tile_n), pl.cdiv(n, 128) * 128)
    n_pad = pl.cdiv(n, tile_n) * tile_n
    grid_n = n_pad // tile_n

    pred_t = jnp.swapaxes(pred, 0, 1)                               # (C, N)
    labels1d = labels.astype(jnp.int32)
    if n_pad != n:
        pred_t = jnp.pad(pred_t, ((0, 0), (0, n_pad - n)))
        labels1d = jnp.pad(labels1d, (0, n_pad - n))
    labels2d = labels1d.reshape(1, n_pad)

    kernel = functools.partial(_gce_kernel, q=float(q), total_n=int(n), tile_n=int(tile_n))

    per_example = pl.pallas_call(
        kernel,
        out_shape=jax.ShapeDtypeStruct((1, n_pad), jnp.float32),
        grid_spec=pltpu.PrefetchScalarGridSpec(
            num_scalar_prefetch=0,
            grid=(grid_n,),
            in_specs=[
                pl.BlockSpec((1, tile_n), lambda i: (0, i)),        # labels (1, N)
                pl.BlockSpec((c, tile_n), lambda i: (0, i)),        # logits (C, N)
            ],
            out_specs=pl.BlockSpec((1, tile_n), lambda i: (0, i)),  # per-example loss
        ),
        compiler_params=pltpu.CompilerParams(
            # No cross-step carry: every tile writes its own output block, so
            # the batch axis is truly parallel (shards across both TCs on v7x).
            dimension_semantics=("parallel",),
        ),
    )(labels2d, pred_t)

    return jnp.sum(per_example) / n


def gce_loss_ref(pred, labels, *, num_classes=10, q=0.7):
    p = jax.nn.softmax(pred.astype(jnp.float32), axis=1)
    p = jnp.clip(p, 1e-6, 1.0)
    one_hot = jax.nn.one_hot(labels, num_classes, dtype=jnp.float32)
    p_y = jnp.sum(one_hot * p, axis=1)
    return jnp.mean((1.0 - jnp.power(p_y, q)) / q)


if __name__ == "__main__":
    num_classes = 10
    q = 0.7
    n = 200  # not a multiple of 128 -> exercises padding + in-kernel masking

    key = jax.random.PRNGKey(0)
    k1, k2 = jax.random.split(key)
    pred = jax.random.normal(k1, (n, num_classes), dtype=jnp.float32)
    labels = jax.random.randint(k2, (n,), 0, num_classes, dtype=jnp.int32)

    out = jax.block_until_ready(gce_loss(pred, labels, num_classes=num_classes, q=q))
    ref = gce_loss_ref(pred, labels, num_classes=num_classes, q=q)
    assert jnp.allclose(out, ref, rtol=1e-5, atol=1e-5), (out, ref)

    print("KERNEL_OK")
</pallas_src>

<mosaic_0001>
module attributes {stable_mosaic.version = 11 : i64} {
  func.func @_gce_kernel(%arg0: i32, %arg1: memref<1x256xi32, #tpu.memory_space<vmem>>, %arg2: memref<10x256xf32, #tpu.memory_space<vmem>>, %arg3: memref<1x256xf32, #tpu.memory_space<vmem>>) attributes {dimension_semantics = [#tpu.dimension_semantics<parallel>], iteration_bounds = array<i64: 1>, scalar_prefetch = 0 : i64, scratch_operands = 0 : i64, tpu.core_type = #tpu.core_type<tc>, window_params = [{transform_indices = @transform_0, window_bounds = array<i64: 1, 256>}, {transform_indices = @transform_1, window_bounds = array<i64: 10, 256>}, {transform_indices = @transform_2, window_bounds = array<i64: 1, 256>}]} {
    %c0 = arith.constant 0 : index
    %c0_0 = arith.constant 0 : index
    %0 = vector.load %arg2[%c0, %c0_0] : memref<10x256xf32, #tpu.memory_space<vmem>>, vector<10x256xf32>
    %c0_1 = arith.constant 0 : index
    %c0_2 = arith.constant 0 : index
    %1 = vector.load %arg1[%c0_1, %c0_2] : memref<1x256xi32, #tpu.memory_space<vmem>>, vector<1x256xi32>
    %cst = arith.constant dense<0xFF800000> : vector<256xf32>
    %2 = vector.multi_reduction <maximumf>, %0, %cst [0] : vector<10x256xf32> to vector<256xf32>
    %3 = vector.shape_cast %2 : vector<256xf32> to vector<1x256xf32>
    %4 = vector.broadcast %3 : vector<1x256xf32> to vector<10x256xf32>
    %5 = arith.subf %0, %4 : vector<10x256xf32>
    %6 = math.exp %5 : vector<10x256xf32>
    %cst_3 = arith.constant dense<0.000000e+00> : vector<256xf32>
    %7 = vector.multi_reduction <add>, %6, %cst_3 [0] : vector<10x256xf32> to vector<256xf32>
    %8 = vector.shape_cast %7 : vector<256xf32> to vector<1x256xf32>
    %9 = tpu.iota {dimensions = array<i32: 0>} : vector<10x256xi32>
    %10 = vector.broadcast %1 : vector<1x256xi32> to vector<10x256xi32>
    %11 = arith.cmpi eq, %9, %10 : vector<10x256xi32>
    %12 = arith.extui %11 : vector<10x256xi1> to vector<10x256xi32>
    %13 = arith.sitofp %12 : vector<10x256xi32> to vector<10x256xf32>
    %14 = arith.mulf %13, %6 : vector<10x256xf32>
    %cst_4 = arith.constant dense<0.000000e+00> : vector<256xf32>
    %15 = vector.multi_reduction <add>, %14, %cst_4 [0] : vector<10x256xf32> to vector<256xf32>
    %16 = vector.shape_cast %15 : vector<256xf32> to vector<1x256xf32>
    %17 = tpu.reciprocal %8 {approx = true} : vector<1x256xf32> -> vector<1x256xf32>
    %18 = arith.mulf %8, %17 : vector<1x256xf32>
    %cst_5 = arith.constant 2.000000e+00 : f32
    %19 = vector.broadcast %cst_5 : f32 to vector<1x256xf32>
    %20 = arith.subf %19, %18 : vector<1x256xf32>
    %21 = arith.mulf %17, %20 : vector<1x256xf32>
    %22 = arith.mulf %16, %21 : vector<1x256xf32>
    %cst_6 = arith.constant 9.99999997E-7 : f32
    %cst_7 = arith.constant 1.000000e+00 : f32
    %23 = vector.broadcast %cst_6 : f32 to vector<1x256xf32>
    %24 = arith.maximumf %23, %22 : vector<1x256xf32>
    %25 = vector.broadcast %cst_7 : f32 to vector<1x256xf32>
    %26 = arith.minimumf %25, %24 : vector<1x256xf32>
    %27 = math.log %26 : vector<1x256xf32>
    %cst_8 = arith.constant 0.699999988 : f32
    %28 = vector.broadcast %cst_8 : f32 to vector<1x256xf32>
    %29 = arith.mulf %28, %27 : vector<1x256xf32>
    %30 = math.exp %29 : vector<1x256xf32>
    %cst_9 = arith.constant 1.000000e+00 : f32
    %31 = vector.broadcast %cst_9 : f32 to vector<1x256xf32>
    %32 = arith.subf %31, %30 : vector<1x256xf32>
    %cst_10 = arith.constant 1.42857146 : f32
    %33 = vector.broadcast %cst_10 : f32 to vector<1x256xf32>
    %34 = arith.mulf %32, %33 : vector<1x256xf32>
    %35 = tpu.iota {dimensions = array<i32: 1>} : vector<1x256xi32>
    %c256_i32 = arith.constant 256 : i32
    %36 = arith.muli %arg0, %c256_i32 : i32
    %37 = vector.broadcast %36 : i32 to vector<1x256xi32>
    %38 = arith.addi %35, %37 : vector<1x256xi32>
    %c200_i32 = arith.constant 200 : i32
    %39 = vector.broadcast %c200_i32 : i32 to vector<1x256xi32>
    %40 = arith.cmpi slt, %38, %39 : vector<1x256xi32>
    %cst_11 = arith.constant 0.000000e+00 : f32
    %41 = vector.broadcast %cst_11 : f32 to vector<1x256xf32>
    %42 = arith.select %40, %34, %41 : vector<1x256xi1>, vector<1x256xf32>
    %c0_12 = arith.constant 0 : index
    %c0_13 = arith.constant 0 : index
    %43 = vector.load %arg3[%c0_12, %c0_13] : memref<1x256xf32, #tpu.memory_space<vmem>>, vector<1x256xf32>
    tpu.vector_store %arg3[%c0_12, %c0_13], %42 {strides = array<i32>} : memref<1x256xf32, #tpu.memory_space<vmem>>, vector<1x256xf32>,
    return
  }
  func.func @transform_0(%arg0: i32) -> (i32, i32) {
    %c0_i32 = arith.constant 0 : i32
    %c0_i32_0 = arith.constant 0 : i32
    return %c0_i32, %arg0 : i32, i32
  }
  func.func @transform_1(%arg0: i32) -> (i32, i32) {
    %c0_i32 = arith.constant 0 : i32
    %c0_i32_0 = arith.constant 0 : i32
    return %c0_i32, %arg0 : i32, i32
  }
  func.func @transform_2(%arg0: i32) -> (i32, i32) {
    %c0_i32 = arith.constant 0 : i32
    %c0_i32_0 = arith.constant 0 : i32
    return %c0_i32, %arg0 : i32, i32
  }
}

</mosaic_0001>

<llo_original>
// kernel: tpu_custom_call.1
$region0: #{tpu_custom_call.1}
  #allocation0 [shape = 'u32[]', space=smem, size = 0x4, offset = 0x4, fixed_abs, tag = 'smem constant byte address 0x4 - core index']
  #allocation1 [shape = 'u32[72,128]{1,0:T(1,128)}', space=vmem, size = 0x9000, scoped, tag = 'internal scratch']
  %s0 = inlined_call_operand.hbm [shape: s32[1,256], index: 0, kind: input, shape index: {}]
  %s1 = inlined_call_operand.hbm [shape: f32[10,256], index: 1, kind: input, shape index: {}]
  %s2 = inlined_call_operand.hbm [shape: f32[1,256], index: 2, kind: output, shape index: {}]
  %s3 = sld [smem:[#allocation0]]
  $region26: #{tpu_custom_call.1} parent=0
    _
  %s5 = ssub.s32 1, %s3
  %s6 = scalar_select 0, %s5, %s3
  $region1: #{tpu_custom_call.1} parent=0
    #allocation2 [shape = 'u8[1024]{0}', space=vmem, size = 0x400, scoped, tag = 'input window, operand 0, single buffered']
    #allocation3 [shape = 's32[1]{0}', space=sflag, size = 0x4, scoped, tag = 'scoped memory for tpu_custom_call.1']
    #allocation4 [shape = 's32[1]{0}', space=sflag, size = 0x4, scoped, tag = 'scoped memory for tpu_custom_call.1']
    #allocation5 [shape = 'u8[16384]{0}', space=vmem, size = 0x4000, scoped, tag = 'input window, operand 1, single buffered']
    #allocation6 [shape = 's32[1]{0}', space=sflag, size = 0x4, scoped, tag = 'scoped memory for tpu_custom_call.1']
    #allocation7 [shape = 'u8[1024]{0}', space=vmem, size = 0x400, scoped, tag = 'output window, operand 0, single buffered']
    %7 = vsyncpa [#allocation3], 0
    %8 = vsyncpa [#allocation6], 0
    %9 = vsyncpa [#allocation4], 0
    // Predicated region
    $region2: #{tpu_custom_call.1} parent=1 // pred_check
      _
    $region3: #{tpu_custom_call.1} parent=1 // pred_check_branch
      %11 = sbr.rel (0) target = $region5
    $region4: #{tpu_custom_call.1} parent=1 // pred_region
      %13 = vsyncadd [#allocation3], 0
      %s15 = sshll.u32 %s0, 4
      %s16 = int_to_ptr.hbm [resolvable:$true] %s15
      %s17 = sshll.u32 [#allocation2], 4
      %s18 = int_to_ptr.vmem [resolvable:$true] %s17
      %20 = dma.hbm_to_vmem [thread:$0]  %s16, 32, %s18, [#allocation3]
    $region5: #{tpu_custom_call.1} parent=1 // pred_fallthru
      _
    // Predicated region
    $region6: #{tpu_custom_call.1} parent=1 // pred_check
      _
    $region7: #{tpu_custom_call.1} parent=1 // pred_check_branch
      %22 = sbr.rel (0) target = $region9
    $region8: #{tpu_custom_call.1} parent=1 // pred_region
      %24 = vsyncadd [#allocation6], 0
      %s25 = sshll.u32 %s1, 4
      %s26 = int_to_ptr.hbm [resolvable:$true] %s25
      %s27 = sshll.u32 [#allocation5], 4
      %s28 = int_to_ptr.vmem [resolvable:$true] %s27
      %33 = dma.hbm_to_vmem [thread:$0]  %s26, 512, %s28, [#allocation6], 256, 256, 16
    $region9: #{tpu_custom_call.1} parent=1 // pred_fallthru
      _
    // Predicated region
    $region10: #{tpu_custom_call.1} parent=1 // pred_check
      _
    $region11: #{tpu_custom_call.1} parent=1 // pred_check_branch
      %35 = sbr.rel (0) target = $region13
    $region12: #{tpu_custom_call.1} parent=1 // pred_region
      %37 = dma.done [#allocation3], 32
    $region13: #{tpu_custom_call.1} parent=1 // pred_fallthru
      _
    // Predicated region
    $region14: #{tpu_custom_call.1} parent=1 // pred_check
      _
    $region15: #{tpu_custom_call.1} parent=1 // pred_check_branch
      %39 = sbr.rel (0) target = $region17
    $region16: #{tpu_custom_call.1} parent=1 // pred_region
      %41 = dma.done [#allocation6], 512
    $region17: #{tpu_custom_call.1} parent=1 // pred_fallthru
      _
    %v42 = vld [vmem:[#allocation5] sm:$0xff]
    %v43 = vld [vmem:[#allocation5 + $0x8] sm:$0xff]
    %v44 = vld [vmem:[#allocation5 + $0x10] sm:$0x3]
    %v45 = vld [vmem:[#allocation5 + $0x18] sm:$0x3]
    %v46 = vld [vmem:[#allocation2] sm:$0x3]
    %vm47 = vcmask 1041408
    %v48 = vsel %vm47, %v44, -inf
    %v49 = vmax.f32 %v42, %v48
    %v50 = vrot.slane %v49, 4
    %v51 = vmax.f32 %v49, %v50
    %v52 = vrot.slane %v51, 2
    %v53 = vmax.f32 %v51, %v52
    %v54 = vrot.slane %v53, 1
    %v55 = vmax.f32 %v53, %v54
    %v56 = vsel %vm47, %v45, -inf
    %v57 = vmax.f32 %v43, %v56
    %v58 = vrot.slane %v57, 4
    %v59 = vmax.f32 %v57, %v58
    %v60 = vrot.slane %v59, 2
    %v61 = vmax.f32 %v59, %v60
    %v62 = vrot.slane %v61, 1
    %v63 = vmax.f32 %v61, %v62
    %v64 = vsub.f32 %v42, %v55
    %v65 = vsub.f32 %v43, %v63
    %v66 = vsub.f32 %v44, %v55
    %v67 = vsub.f32 %v45, %v63
    %v68 = vmul.f32 %v64, 1.442695
    %v69 = vpow.pop %v68
    %v70 = vmul.f32 %v65, 1.442695
    %v71 = vpow.pop %v70
    %v72 = vmul.f32 %v66, 1.442695
    %v73 = vpow.pop %v72
    %v74 = vmul.f32 %v67, 1.442695
    %v75 = vpow.pop %v74
    %v76 = vsel %vm47, %v73, 0.0
    %v77 = vadd.f32 %v69, %v76
    %v78 = vrot.slane %v77, 4
    %v79 = vadd.f32 %v77, %v78
    %v80 = vrot.slane %v79, 2
    %v81 = vadd.f32 %v79, %v80
    %v82 = vrot.slane %v81, 1
    %v83 = vadd.f32 %v81, %v82
    %v84 = vsel %vm47, %v75, 0.0
    %v85 = vadd.f32 %v71, %v84
    %v86 = vrot.slane %v85, 4
    %v87 = vadd.f32 %v85, %v86
    %v88 = vrot.slane %v87, 2
    %v89 = vadd.f32 %v87, %v88
    %v90 = vrot.slane %v89, 1
    %v91 = vadd.f32 %v89, %v90
    %v92 = vlaneseq
    %v93 = vshrl.u32 %v92, 7
    %v94 = vadd.s32 %v93, 8
    %v95 = vperm.slane %v46, 0
    %v96 = vperm.slane %v46, 1
    %vm97 = vcmp.eq.s32.totalorder %v93, %v95
    %vm98 = vcmp.eq.s32.totalorder %v93, %v96
    %vm99 = vcmp.eq.s32.totalorder %v94, %v95
    %vm100 = vcmp.eq.s32.totalorder %v94, %v96
    %v101 = vsel %vm97, 1, 0
    %v102 = vsel %vm98, 1, 0
    %v103 = vsel %vm99, 1, 0
    %v104 = vsel %vm100, 1, 0
    %v105 = vcvt.s32.f32 %v101
    %v106 = vcvt.s32.f32 %v102
    %v107 = vcvt.s32.f32 %v103
    %v108 = vcvt.s32.f32 %v104
    %v109 = vmul.f32 %v105, %v69
    %v110 = vmul.f32 %v106, %v71
    %v111 = vmul.f32 %v107, %v73
    %v112 = vmul.f32 %v108, %v75
    %v113 = vsel %vm47, %v111, 0.0
    %v114 = vadd.f32 %v109, %v113
    %v115 = vrot.slane %v114, 4
    %v116 = vadd.f32 %v114, %v115
    %v117 = vrot.slane %v116, 2
    %v118 = vadd.f32 %v116, %v117
    %v119 = vrot.slane %v118, 1
    %v120 = vadd.f32 %v118, %v119
    %v121 = vsel %vm47, %v112, 0.0
    %v122 = vadd.f32 %v110, %v121
    %v123 = vrot.slane %v122, 4
    %v124 = vadd.f32 %v122, %v123
    %v125 = vrot.slane %v124, 2
    %v126 = vadd.f32 %v124, %v125
    %v127 = vrot.slane %v126, 1
    %v128 = vadd.f32 %v126, %v127
    %v129 = vrcp.pop %v83
    %v130 = vrcp.pop %v91
    %v131 = vmul.f32 %v83, %v129
    %v132 = vmul.f32 %v91, %v130
    %v133 = vsub.f32 2.0, %v131
    %v134 = vsub.f32 2.0, %v132
    %v135 = vmul.f32 %v129, %v133
    %v136 = vmul.f32 %v130, %v134
    %v137 = vmul.f32 %v120, %v135
    %v138 = vmul.f32 %v128, %v136
    %v139 = vmax.f32 %v137, 1e-06
    %v140 = vmax.f32 %v138, 1e-06
    %v141 = vmin.f32 %v139, 1.0
    %v142 = vmin.f32 %v140, 1.0
    %v143 = vlog2.pop %v141
    %v144 = vmul.f32 %v143, 0.6931472
    %v145 = vlog2.pop %v142
    %v146 = vmul.f32 %v145, 0.6931472
    %v147 = vmul.f32 %v144, 0.7
    %v148 = vmul.f32 %v146, 0.7
    %v149 = vmul.f32 %v147, 1.442695
    %v150 = vpow.pop %v149
    %v151 = vmul.f32 %v148, 1.442695
    %v152 = vpow.pop %v151
    %v153 = vsub.f32 1.0, %v150
    %v154 = vsub.f32 1.0, %v152
    %v155 = vmul.f32 %v153, 1.4285715
    %v156 = vmul.f32 %v154, 1.4285715
    %v157 = vlaneseq
    %v158 = vand.u32 %v157, 127
    %v159 = vadd.s32 %v158, 128
    %s160 = smul.u32 0, 256
    %v161 = vstv %s160
    %v162 = vadd.s32 %v158, %v161
    %v163 = vadd.s32 %v159, %v161
    %vm164 = vcmp.lt.s32.totalorder %v162, 200
    %vm165 = vcmp.lt.s32.totalorder %v163, 200
    %v166 = vsel %vm164, %v155, 0.0
    %v167 = vsel %vm165, %v156, 0.0
    %v170 = vrot.slane %v167, 7
    %vm171 = vcmask 1040384
    %v172 = vsel %vm171, %v166, %v170
    %v174 = vlaneseq
    %vm175 = vcmp.ge.s32.totalorder %v174, 0
    %vm176 = vcmp.lt.s32.totalorder %v174, 256
    %vm177 = vmand %vm175, %vm176
    %178 = vst.msk [vmem:[#allocation7] sm:$0x3] %vm177, %v172
    // Predicated region
    $region18: #{tpu_custom_call.1} parent=1 // pred_check
      _
    $region19: #{tpu_custom_call.1} parent=1 // pred_check_branch
      %180 = sbr.rel (0) target = $region21
    $region20: #{tpu_custom_call.1} parent=1 // pred_region
      %182 = vsyncadd [#allocation4], 0
      %s184 = sshll.u32 [#allocation7], 4
      %s185 = int_to_ptr.vmem [resolvable:$true] %s184
      %s186 = sshll.u32 %s2, 4
      %s187 = int_to_ptr.hbm [resolvable:$true] %s186
      %189 = dma.vmem_to_hbm [thread:$0]  %s185, 32, %s187, [#allocation4]
    $region21: #{tpu_custom_call.1} parent=1 // pred_fallthru
      _
    // Predicated region
    $region22: #{tpu_custom_call.1} parent=1 // pred_check
      _
    $region23: #{tpu_custom_call.1} parent=1 // pred_check_branch
      %191 = sbr.rel (0) target = $region25
    $region24: #{tpu_custom_call.1} parent=1 // pred_region
      %193 = dma.done [#allocation4], 32
    $region25: #{tpu_custom_call.1} parent=1 // pred_fallthru
      _
    %194 = vsyncpa [#allocation3], 1
    %195 = vsyncpa [#allocation6], 1
    %196 = vsyncpa [#allocation4], 1

</llo_original>
